<compile_context>
chip_gen: v6e
topology: v6e:2x2x1
jax: 0.10.0
libtpu: 0.0.40
codegen_flags: <defaults>
</compile_context>

<pallas_src>
import functools

import jax
import jax.numpy as jnp
from jax.experimental import pallas as pl
from jax.experimental.pallas import tpu as pltpu

LANE = 128
SUBLANE_BF16 = 16   # bf16 vregs pack [16, 128]; keep activation rows tile-native


def _round_up(n, m):
    return ((n + m - 1) // m) * m


def rnn_seq_kernel(xwxb_ref, h0_ref, wh_ref, ls_ref, hid_ref, h_scratch, *, hp):
    """One grid step == one RNN time step.

    xwxb_ref : (1, BP, N) f32   precomputed x @ Wx + bias (mask baked in)
    h0_ref   : (BP, HP)  bf16   initial hidden (VMEM resident)
    wh_ref   : (HP, N)   bf16   fused recurrent weight (VMEM resident)
    ls_ref   : (1, BP, OP) f32  per-step log-softmax output
    hid_ref  : (BP, HP)  f32    final hidden (written only at t == T-1)
    h_scratch: (BP, HP)  bf16   hidden carry across grid iterations
    """
    t = pl.program_id(0)

    @pl.when(t == 0)
    def _():
        h_scratch[...] = h0_ref[...]

    # Single in-loop MXU pass: h @ Wh (f32 accumulation); input projection
    # and bias were hoisted outside the recurrence into xwxb.
    acc = xwxb_ref[0] + jnp.dot(h_scratch[...], wh_ref[...],
                                preferred_element_type=jnp.float32)

    hid = acc[:, :hp]       # hidden lanes [0, HP)   (128-aligned slice)
    logits = acc[:, hp:]    # logit lanes  [HP, N)   (padded lanes sit at -1e30)

    # Numerically stable log-softmax over dim=1; padded lanes hold -1e30 so
    # they never win the max and exp() underflows to 0 (no -inf / NaN).
    m = jnp.max(logits, axis=1, keepdims=True)
    shifted = logits - m
    lse = jnp.log(jnp.sum(jnp.exp(shifted), axis=1, keepdims=True))
    ls_ref[0] = shifted - lse

    # Carry hidden for the next step (bf16, MXU-ready).
    h_scratch[...] = hid.astype(h_scratch.dtype)

    @pl.when(t == pl.num_programs(0) - 1)
    def _():
        hid_ref[...] = hid


def fuse_params(wh_t, bh, wo_t, bo, input_size):
    """Pack i2h (C,H) and i2o (C,O) into one lane-padded (C, HP+OP) weight,
    bake the padded-logit mask into the bias, and split by rows into
    Wx (I, N) (hoisted input projection) and Wh (HP, N) (recurrent, row-padded).
    One-time transform per model."""
    C, H = wh_t.shape
    O = wo_t.shape[1]
    I = input_size
    HP = _round_up(H, LANE)
    OP = _round_up(O, LANE)
    N = HP + OP

    w_f = jnp.zeros((C, N), jnp.float32)
    w_f = w_f.at[:, :H].set(wh_t)
    w_f = w_f.at[:, HP:HP + O].set(wo_t)

    b_f = jnp.zeros((1, N), jnp.float32)
    b_f = b_f.at[:, :H].set(bh.reshape(1, H))
    b_f = b_f.at[:, HP:HP + O].set(bo.reshape(1, O))
    # Large FINITE negative on padded logit lanes: removes the per-step
    # iota/compare/select from the kernel and avoids inf-inf NaN corner cases.
    b_f = b_f.at[:, HP + O:].set(-1e30)

    wx_f = w_f[:I].astype(jnp.bfloat16)                      # (I, N)
    wh_p = (jnp.zeros((HP, N), jnp.float32)
            .at[:H].set(w_f[I:])                             # rows that hit h
            .astype(jnp.bfloat16))                           # (HP, N), row-padded
    return wx_f, wh_p, b_f


def rnn_forward_sequence(xs, h0, wx_f, wh_p, b_f, hidden_size, output_size):
    """Run T module-forward steps in ONE pallas_call.

    xs: (T, B, I) f32, h0: (B, H) f32.
    Returns (log_softmax (T, B, O) f32, final hidden (B, H) f32)."""
    T, B, I = xs.shape
    H = h0.shape[1]
    N = wx_f.shape[1]
    HP = _round_up(hidden_size, LANE)
    OP = N - HP
    BP = _round_up(B, SUBLANE_BF16)

    # One pad/cast for the whole sequence (not per step).
    xs_p = jnp.pad(xs, ((0, 0), (0, BP - B), (0, 0))).astype(jnp.bfloat16)
    h0_p = jnp.pad(h0, ((0, BP - B), (0, HP - H))).astype(jnp.bfloat16)

    # Hoisted input projection: one big matmul (M = T*BP) outside the
    # recurrence; fused bias (with baked mask) folds in here too.
    xwxb = jnp.einsum("tbi,in->tbn", xs_p, wx_f,
                      preferred_element_type=jnp.float32) + b_f[None]

    kernel = functools.partial(rnn_seq_kernel, hp=HP)

    ls_p, hid_p = pl.pallas_call(
        kernel,
        out_shape=(
            jax.ShapeDtypeStruct((T, BP, OP), jnp.float32),  # log-softmax, lane-dense
            jax.ShapeDtypeStruct((BP, HP), jnp.float32),     # final hidden, lane-dense
        ),
        grid=(T,),
        in_specs=[
            pl.BlockSpec((1, BP, N), lambda t: (t, 0, 0)),   # per-step input slab
            pl.BlockSpec((BP, HP), lambda t: (0, 0)),        # h0 (VMEM resident)
            pl.BlockSpec((HP, N), lambda t: (0, 0)),         # Wh (VMEM resident)
        ],
        out_specs=(
            pl.BlockSpec((1, BP, OP), lambda t: (t, 0, 0)),
            pl.BlockSpec((BP, HP), lambda t: (0, 0)),        # written at t==T-1 only
        ),
        scratch_shapes=[pltpu.VMEM((BP, HP), jnp.bfloat16)], # hidden carry
        compiler_params=pltpu.CompilerParams(
            dimension_semantics=("arbitrary",)),             # sequential recurrence
    )(xwxb, h0_p, wh_p)

    # Slice the padding off once for the whole sequence (not per step).
    return ls_p[:, :B, :output_size], hid_p[:B, :hidden_size]


def rnn_forward(x, h, wx_f, wh_p, b_f, hidden_size, output_size):
    """Single step == the module's forward(input, hidden)."""
    ls, hid = rnn_forward_sequence(x[None], h, wx_f, wh_p, b_f,
                                   hidden_size, output_size)
    return ls[0], hid


def _ref_step(x, h, wh_t, bh, wo_t, bo):
    """Pure-JAX reference for one module forward() step, mirroring the
    kernel's bf16 inputs / f32 accumulation."""
    xb = x.astype(jnp.bfloat16).astype(jnp.float32)
    hb = h.astype(jnp.bfloat16).astype(jnp.float32)
    whb = wh_t.astype(jnp.bfloat16).astype(jnp.float32)
    wob = wo_t.astype(jnp.bfloat16).astype(jnp.float32)
    combined = jnp.concatenate([xb, hb], axis=1)
    hidden_new = combined @ whb + bh
    logits = combined @ wob + bo
    ls = logits - jax.scipy.special.logsumexp(logits, axis=1, keepdims=True)
    return ls, hidden_new


if __name__ == "__main__":
    # Module config: Linear(I+H -> H), Linear(I+H -> O), LogSoftmax(dim=1)
    input_size, hidden_size, output_size, num_layers = 16, 32, 8, 1
    batch, seq_len = 2, 8

    key = jax.random.PRNGKey(0)
    kx, kwh, kbh, kwo, kbo = jax.random.split(key, 5)

    xs = jax.random.normal(kx, (seq_len, batch, input_size), dtype=jnp.float32)
    h0 = jnp.zeros((batch, hidden_size), dtype=jnp.float32)   # initHidden-style

    C = input_size + hidden_size
    bound = 1.0 / jnp.sqrt(jnp.float32(C))
    wh_t = jax.random.uniform(kwh, (C, hidden_size), jnp.float32, -bound, bound)
    bh = jax.random.uniform(kbh, (1, hidden_size), jnp.float32, -bound, bound)
    wo_t = jax.random.uniform(kwo, (C, output_size), jnp.float32, -bound, bound)
    bo = jax.random.uniform(kbo, (1, output_size), jnp.float32, -bound, bound)

    # One-time param fusion (done once per model, never per step).
    wx_f, wh_p, b_f = fuse_params(wh_t, bh, wo_t, bo, input_size)

    # --- full sequence: one pallas_call, T steps ---
    ls_seq, hid_final = rnn_forward_sequence(xs, h0, wx_f, wh_p, b_f,
                                             hidden_size, output_size)
    # --- single step (module forward() contract) ---
    ls_1, hid_1 = rnn_forward(xs[0], h0, wx_f, wh_p, b_f,
                              hidden_size, output_size)
    jax.block_until_ready((ls_seq, hid_final, ls_1, hid_1))

    # Pure-JAX reference: apply the module forward() step by step.
    h_ref = h0
    ls_refs = []
    for t in range(seq_len):
        ls_t, h_ref = _ref_step(xs[t], h_ref, wh_t, bh, wo_t, bo)
        ls_refs.append(ls_t)
    ls_ref_seq = jnp.stack(ls_refs, axis=0)

    assert ls_seq.shape == (seq_len, batch, output_size)
    assert hid_final.shape == (batch, hidden_size)
    assert ls_1.shape == (batch, output_size)
    assert hid_1.shape == (batch, hidden_size)

    # TODO(synk): parity with PyTorch f32 nn.Linear is to bf16-matmul tolerance
    # (weights/activations on the MXU in bf16 with f32 accumulation).
    assert jnp.allclose(ls_seq, ls_ref_seq, atol=1e-2), "sequence log_softmax mismatch"
    assert jnp.allclose(hid_final, h_ref, atol=1e-2), "final hidden mismatch"
    assert jnp.allclose(ls_1, ls_refs[0], atol=1e-2), "single-step log_softmax mismatch"
    assert jnp.allclose(hid_1, _ref_step(xs[0], h0, wh_t, bh, wo_t, bo)[1],
                        atol=1e-2), "single-step hidden mismatch"

    print("KERNEL_OK")
</pallas_src>

<mosaic_0001>
module attributes {stable_mosaic.version = 11 : i64} {
  func.func @rnn_seq_kernel(%arg0: i32, %arg1: memref<1x16x256xf32, #tpu.memory_space<vmem>>, %arg2: memref<16x128xbf16, #tpu.memory_space<vmem>>, %arg3: memref<128x256xbf16, #tpu.memory_space<vmem>>, %arg4: memref<1x16x128xf32, #tpu.memory_space<vmem>>, %arg5: memref<16x128xf32, #tpu.memory_space<vmem>>, %arg6: memref<16x128xbf16, #tpu.memory_space<vmem>>) attributes {dimension_semantics = [#tpu.dimension_semantics<arbitrary>], iteration_bounds = array<i64: 8>, scalar_prefetch = 0 : i64, scratch_operands = 1 : i64, tpu.core_type = #tpu.core_type<tc>, window_params = [{transform_indices = @transform_0, window_bounds = array<i64: 1, 16, 256>}, {pipeline_mode = #tpu.pipeline_mode<synchronous>, transform_indices = @transform_1, window_bounds = array<i64: 16, 128>}, {pipeline_mode = #tpu.pipeline_mode<synchronous>, transform_indices = @transform_2, window_bounds = array<i64: 128, 256>}, {transform_indices = @transform_3, window_bounds = array<i64: 1, 16, 128>}, {pipeline_mode = #tpu.pipeline_mode<synchronous>, transform_indices = @transform_4, window_bounds = array<i64: 16, 128>}]} {
    %c0_i32 = arith.constant 0 : i32
    %0 = arith.cmpi eq, %arg0, %c0_i32 : i32
    %1 = arith.extui %0 : i1 to i32
    %c0_i32_0 = arith.constant 0 : i32
    %2 = arith.cmpi ne, %1, %c0_i32_0 : i32
    scf.if %2 {
      %c0_15 = arith.constant 0 : index
      %c0_16 = arith.constant 0 : index
      %29 = vector.load %arg2[%c0_15, %c0_16] : memref<16x128xbf16, #tpu.memory_space<vmem>>, vector<16x128xbf16>
      %c0_17 = arith.constant 0 : index
      %c0_18 = arith.constant 0 : index
      %30 = vector.load %arg6[%c0_17, %c0_18] : memref<16x128xbf16, #tpu.memory_space<vmem>>, vector<16x128xbf16>
      tpu.vector_store %arg6[%c0_17, %c0_18], %29 {strides = array<i32>} : memref<16x128xbf16, #tpu.memory_space<vmem>>, vector<16x128xbf16>,
    } else {
    }
    %c0 = arith.constant 0 : index
    %c0_1 = arith.constant 0 : index
    %c0_2 = arith.constant 0 : index
    %3 = vector.load %arg1[%c0, %c0_1, %c0_2] : memref<1x16x256xf32, #tpu.memory_space<vmem>>, vector<1x16x256xf32>
    %4 = vector.shape_cast %3 : vector<1x16x256xf32> to vector<16x256xf32>
    %c0_3 = arith.constant 0 : index
    %c0_4 = arith.constant 0 : index
    %5 = vector.load %arg6[%c0_3, %c0_4] : memref<16x128xbf16, #tpu.memory_space<vmem>>, vector<16x128xbf16>
    %c0_5 = arith.constant 0 : index
    %c0_6 = arith.constant 0 : index
    %6 = vector.load %arg3[%c0_5, %c0_6] : memref<128x256xbf16, #tpu.memory_space<vmem>>, vector<128x256xbf16>
    %cst = arith.constant dense<0.000000e+00> : vector<16x256xf32>
    %7 = tpu.matmul %5, %6, %cst {dimension_numbers = #tpu.dot_dimension_numbers<[1], [0], [0], [1], [0, 0, 1, 1], [], []>} : vector<16x128xbf16>, vector<128x256xbf16>, vector<16x256xf32> -> vector<16x256xf32>
    %8 = arith.addf %4, %7 : vector<16x256xf32>
    %9 = vector.extract_strided_slice %8 {offsets = [0, 0], sizes = [16, 128], strides = [1, 1]} : vector<16x256xf32> to vector<16x128xf32>
    %10 = vector.extract_strided_slice %8 {offsets = [0, 128], sizes = [16, 128], strides = [1, 1]} : vector<16x256xf32> to vector<16x128xf32>
    %cst_7 = arith.constant dense<0xFF800000> : vector<16xf32>
    %11 = vector.multi_reduction <maximumf>, %10, %cst_7 [1] : vector<16x128xf32> to vector<16xf32>
    %12 = vector.shape_cast %11 : vector<16xf32> to vector<16x1xf32>
    %13 = vector.broadcast %12 : vector<16x1xf32> to vector<16x128xf32>
    %14 = arith.subf %10, %13 : vector<16x128xf32>
    %15 = math.exp %14 : vector<16x128xf32>
    %cst_8 = arith.constant dense<0.000000e+00> : vector<16xf32>
    %16 = vector.multi_reduction <add>, %15, %cst_8 [1] : vector<16x128xf32> to vector<16xf32>
    %17 = vector.shape_cast %16 : vector<16xf32> to vector<16x1xf32>
    %18 = math.log %17 : vector<16x1xf32>
    %19 = vector.broadcast %18 : vector<16x1xf32> to vector<16x128xf32>
    %20 = arith.subf %14, %19 : vector<16x128xf32>
    %c0_9 = arith.constant 0 : index
    %c0_10 = arith.constant 0 : index
    %c0_11 = arith.constant 0 : index
    %21 = vector.load %arg4[%c0_9, %c0_10, %c0_11] : memref<1x16x128xf32, #tpu.memory_space<vmem>>, vector<1x16x128xf32>
    %22 = vector.shape_cast %21 : vector<1x16x128xf32> to vector<16x128xf32>
    %23 = vector.shape_cast %20 : vector<16x128xf32> to vector<1x16x128xf32>
    tpu.vector_store %arg4[%c0_9, %c0_10, %c0_11], %23 {strides = array<i32>} : memref<1x16x128xf32, #tpu.memory_space<vmem>>, vector<1x16x128xf32>,
    %24 = arith.truncf %9 : vector<16x128xf32> to vector<16x128xbf16>
    %c0_12 = arith.constant 0 : index
    %c0_13 = arith.constant 0 : index
    %25 = vector.load %arg6[%c0_12, %c0_13] : memref<16x128xbf16, #tpu.memory_space<vmem>>, vector<16x128xbf16>
    tpu.vector_store %arg6[%c0_12, %c0_13], %24 {strides = array<i32>} : memref<16x128xbf16, #tpu.memory_space<vmem>>, vector<16x128xbf16>,
    %c7_i32 = arith.constant 7 : i32
    %26 = arith.cmpi eq, %arg0, %c7_i32 : i32
    %27 = arith.extui %26 : i1 to i32
    %c0_i32_14 = arith.constant 0 : i32
    %28 = arith.cmpi ne, %27, %c0_i32_14 : i32
    scf.if %28 {
      %c0_15 = arith.constant 0 : index
      %c0_16 = arith.constant 0 : index
      %29 = vector.load %arg5[%c0_15, %c0_16] : memref<16x128xf32, #tpu.memory_space<vmem>>, vector<16x128xf32>
      tpu.vector_store %arg5[%c0_15, %c0_16], %9 {strides = array<i32>} : memref<16x128xf32, #tpu.memory_space<vmem>>, vector<16x128xf32>,
    } else {
    }
    return
  }
  func.func @transform_0(%arg0: i32) -> (i32, i32, i32) {
    %c0_i32 = arith.constant 0 : i32
    %c0_i32_0 = arith.constant 0 : i32
    %c0_i32_1 = arith.constant 0 : i32
    return %arg0, %c0_i32, %c0_i32_0 : i32, i32, i32
  }
  func.func @transform_1(%arg0: i32) -> (i32, i32) {
    %c0_i32 = arith.constant 0 : i32
    %c0_i32_0 = arith.constant 0 : i32
    %c0_i32_1 = arith.constant 0 : i32
    return %c0_i32, %c0_i32_0 : i32, i32
  }
  func.func @transform_2(%arg0: i32) -> (i32, i32) {
    %c0_i32 = arith.constant 0 : i32
    %c0_i32_0 = arith.constant 0 : i32
    %c0_i32_1 = arith.constant 0 : i32
    return %c0_i32, %c0_i32_0 : i32, i32
  }
  func.func @transform_3(%arg0: i32) -> (i32, i32, i32) {
    %c0_i32 = arith.constant 0 : i32
    %c0_i32_0 = arith.constant 0 : i32
    %c0_i32_1 = arith.constant 0 : i32
    return %arg0, %c0_i32, %c0_i32_0 : i32, i32, i32
  }
  func.func @transform_4(%arg0: i32) -> (i32, i32) {
    %c0_i32 = arith.constant 0 : i32
    %c0_i32_0 = arith.constant 0 : i32
    %c0_i32_1 = arith.constant 0 : i32
    return %c0_i32, %c0_i32_0 : i32, i32
  }
}

</mosaic_0001>

<llo_original>
// kernel: tpu_custom_call.1
$region0: #{tpu_custom_call.1}
  #allocation0 [shape = 'u32[]', space=smem, size = 0x4, offset = 0x4, fixed_abs, tag = 'smem constant byte address 0x4 - core index']
  #allocation1 [shape = 'u32[144,128]{1,0:T(1,128)}', space=vmem, size = 0x12000, scoped, tag = 'internal scratch']
  #allocation2 [shape = 'bf16[16,128]{1,0:T(8,128)(2,1)}', space=vmem, size = 0x1000, scoped, tag = 'scratch operand']
  %s0 = inlined_call_operand.hbm [shape: f32[8,16,256], index: 0, kind: input, shape index: {}]
  %s1 = inlined_call_operand.hbm [shape: bf16[16,128], index: 1, kind: input, shape index: {}]
  %s2 = inlined_call_operand.hbm [shape: bf16[128,256], index: 2, kind: input, shape index: {}]
  %s3 = inlined_call_operand.hbm [shape: f32[8,16,128], index: 3, kind: output, shape index: {0}]
  %s4 = inlined_call_operand.hbm [shape: f32[16,128], index: 4, kind: output, shape index: {1}]
  %5 = xla_tuple %s3, %s4
  %s6 = sld [smem:[#allocation0]]
  $region73: #{tpu_custom_call.1} parent=0
    _
  %s8 = ssub.s32 1, %s6
  %s9 = scalar_select 0, %s8, %s6
  $region1: #{tpu_custom_call.1} parent=0
    #allocation3 [shape = 'u8[32768]{0}', space=vmem, size = 0x8000, scoped, tag = 'input window, operand 0']
    #allocation4 [shape = 's32[2]{0}', space=sflag, size = 0x8, scoped, tag = 'scoped memory for tpu_custom_call.1']
    #allocation5 [shape = 's32[2]{0}', space=sflag, size = 0x8, scoped, tag = 'scoped memory for tpu_custom_call.1']
    #allocation6 [shape = 'u8[4096]{0}', space=vmem, size = 0x1000, scoped, tag = 'input window, operand 1, single buffered']
    #allocation7 [shape = 's32[1]{0}', space=sflag, size = 0x4, scoped, tag = 'scoped memory for tpu_custom_call.1']
    #allocation8 [shape = 'u8[65536]{0}', space=vmem, size = 0x10000, scoped, tag = 'input window, operand 2, single buffered']
    #allocation9 [shape = 'u8[16384]{0}', space=vmem, size = 0x4000, scoped, tag = 'output window, operand 0']
    #allocation10 [shape = 'u8[8192]{0}', space=vmem, size = 0x2000, scoped, tag = 'output window, operand 1, single buffered']
    #allocation11 [shape = 's32[1]{0}', space=sflag, size = 0x4, scoped, tag = 'scoped memory for tpu_custom_call.1']
    %10 = vsyncpa [#allocation4], 0
    %s11 = scalar_lea.sflag [#allocation4], 1
    %12 = vsyncpa %s11, 0
    %13 = vsyncpa [#allocation7], 0
    %14 = vsyncpa [#allocation5], 0
    %s15 = scalar_lea.sflag [#allocation5], 1
    %16 = vsyncpa %s15, 0
    %17 = vsyncpa [#allocation11], 0
    loop: start=0, step=1, limit=10
    $region2: #{tpu_custom_call.1} parent=1 // loop_pre_header
      _
    $region3: #{tpu_custom_call.1} parent=1 // loop_header
      %s19 = sphi 0, %s23
      %p20 = scmp.ge.s32.totalorder %s19, 10
      %s29 = sphi 0, %s31
      %s32 = sphi 0, %s29
      %s33 = sphi 0, %s32
      %s49 = sphi 0, %s33
      %s53 = sphi 0, %s53
      %s55 = sphi 0, %s53
      %s56 = sphi 0, %s55
      %s70 = sphi 0, %s56
      %s74 = sphi 0, %s74
      %s76 = sphi 0, %s74
      %s77 = sphi 0, %s76
      %s91 = sphi 0, %s77
      %s97 = sphi 0, %s99
      %s100 = sphi 0, %s97
      %s101 = sphi 0, %s100
      %s117 = sphi 0, %s101
      %s121 = sphi 0, %s121
      %s123 = sphi 0, %s121
      %s124 = sphi 0, %s123
      %s138 = sphi 0, %s124
    $region4: #{tpu_custom_call.1} parent=1 // loop_header_branch
      %22 = sbr.rel (%p20) target = $region8
    $region5: #{tpu_custom_call.1} parent=1 // loop_body
      %s24 = ssub.s32 %s19, 1
      %s25 = ssub.s32 %s19, 2
      %s26 = sadd.s32 %s19, 1
      %s27 = ssub.s32 %s19, %s26
      %p28 = scmp.eq.s32.totalorder %s27, 0
      %s30 = sadd.s32 %s29, 1
      %s31 = scalar_select %p28, %s29, %s30
      %p34 = pneg %p28
      %p35 = scmp.eq.s32.totalorder %s19, 7
      %p36 = por %p34, %p35
      %p37 = scmp.ne.s32.totalorder %s29, %s32
      %p38 = scmp.eq.s32.totalorder %s19, 0
      %p39 = por %p37, %p38
      %p40 = scmp.ne.s32.totalorder %s29, %s32
      %p41 = scmp.eq.s32.totalorder %s24, 7
      %p42 = por %p40, %p41
      %p43 = scmp.ne.s32.totalorder %s32, %s33
      %p44 = scmp.eq.s32.totalorder %s24, 0
      %p45 = por %p43, %p44
      %p46 = scmp.ne.s32.totalorder %s32, %s33
      %p47 = scmp.eq.s32.totalorder %s25, 7
      %p48 = por %p46, %p47
      %p50 = scmp.ne.s32.totalorder %s33, %s49
      %p51 = scmp.eq.s32.totalorder %s25, 0
      %p52 = por %p50, %p51
      %s54 = sadd.s32 %s53, 1
      %p57 = scmp.eq.s32.totalorder %s19, 7
      %p58 = scmp.ne.s32.totalorder %s53, %s55
      %p59 = scmp.eq.s32.totalorder %s19, 0
      %p60 = por %p58, %p59
      %p61 = scmp.ne.s32.totalorder %s53, %s55
      %p62 = scmp.eq.s32.totalorder %s24, 7
      %p63 = por %p61, %p62
      %p64 = scmp.ne.s32.totalorder %s55, %s56
      %p65 = scmp.eq.s32.totalorder %s24, 0
      %p66 = por %p64, %p65
      %p67 = scmp.ne.s32.totalorder %s55, %s56
      %p68 = scmp.eq.s32.totalorder %s25, 7
      %p69 = por %p67, %p68
      %p71 = scmp.ne.s32.totalorder %s56, %s70
      %p72 = scmp.eq.s32.totalorder %s25, 0
      %p73 = por %p71, %p72
      %s75 = sadd.s32 %s74, 1
      %p78 = scmp.eq.s32.totalorder %s19, 7
      %p79 = scmp.ne.s32.totalorder %s74, %s76
      %p80 = scmp.eq.s32.totalorder %s19, 0
      %p81 = por %p79, %p80
      %p82 = scmp.ne.s32.totalorder %s74, %s76
      %p83 = scmp.eq.s32.totalorder %s24, 7
      %p84 = por %p82, %p83
      %p85 = scmp.ne.s32.totalorder %s76, %s77
      %p86 = scmp.eq.s32.totalorder %s24, 0
      %p87 = por %p85, %p86
      %p88 = scmp.ne.s32.totalorder %s76, %s77
      %p89 = scmp.eq.s32.totalorder %s25, 7
      %p90 = por %p88, %p89
      %p92 = scmp.ne.s32.totalorder %s77, %s91
      %p93 = scmp.eq.s32.totalorder %s25, 0
      %p94 = por %p92, %p93
      %s95 = ssub.s32 %s19, %s26
      %p96 = scmp.eq.s32.totalorder %s95, 0
      %s98 = sadd.s32 %s97, 1
      %s99 = scalar_select %p96, %s97, %s98
      %p102 = pneg %p96
      %p103 = scmp.eq.s32.totalorder %s19, 7
      %p104 = por %p102, %p103
      %p105 = scmp.ne.s32.totalorder %s97, %s100
      %p106 = scmp.eq.s32.totalorder %s19, 0
      %p107 = por %p105, %p106
      %p108 = scmp.ne.s32.totalorder %s97, %s100
      %p109 = scmp.eq.s32.totalorder %s24, 7
      %p110 = por %p108, %p109
      %p111 = scmp.ne.s32.totalorder %s100, %s101
      %p112 = scmp.eq.s32.totalorder %s24, 0
      %p113 = por %p111, %p112
      %p114 = scmp.ne.s32.totalorder %s100, %s101
      %p115 = scmp.eq.s32.totalorder %s25, 7
      %p116 = por %p114, %p115
      %p118 = scmp.ne.s32.totalorder %s101, %s117
      %p119 = scmp.eq.s32.totalorder %s25, 0
      %p120 = por %p118, %p119
      %s122 = sadd.s32 %s121, 1
      %p125 = scmp.eq.s32.totalorder %s19, 7
      %p126 = scmp.ne.s32.totalorder %s121, %s123
      %p127 = scmp.eq.s32.totalorder %s19, 0
      %p128 = por %p126, %p127
      %p129 = scmp.ne.s32.totalorder %s121, %s123
      %p130 = scmp.eq.s32.totalorder %s24, 7
      %p131 = por %p129, %p130
      %p132 = scmp.ne.s32.totalorder %s123, %s124
      %p133 = scmp.eq.s32.totalorder %s24, 0
      %p134 = por %p132, %p133
      %p135 = scmp.ne.s32.totalorder %s123, %s124
      %p136 = scmp.eq.s32.totalorder %s25, 7
      %p137 = por %p135, %p136
      %p139 = scmp.ne.s32.totalorder %s124, %s138
      %p140 = scmp.eq.s32.totalorder %s25, 0
      %p141 = por %p139, %p140
      %p142 = scmp.le.s32.totalorder 1, %s19
      %p143 = scmp.lt.s32.totalorder %s19, 9
      %p144 = pnand %p142, %p143
      %p145 = pneg %p144
      // Predicated region
      $region9: #{tpu_custom_call.1} parent=5 // pred_check
        _
      $region10: #{tpu_custom_call.1} parent=5 // pred_check_branch
        %147 = sbr.rel (%p144) target = $region12
      $region11: #{tpu_custom_call.1} parent=5 // pred_region
        %s148 = ssub.s32 %s19, 1
        // Predicated region
        $region13: #{tpu_custom_call.1} parent=11 // pred_check
          %p149 = pneg %p66
        $region14: #{tpu_custom_call.1} parent=11 // pred_check_branch
          %151 = sbr.rel (%p149) target = $region16
        $region15: #{tpu_custom_call.1} parent=11 // pred_region
          %s153 = ssub.s32 128, 128
          %154 = vsyncadd [#allocation7], %s153
          %s155 = sshll.u32 [#allocation6], 4
          %s156 = int_to_ptr.vmem [resolvable:$true] %s155
          %161 = dma.hbm_to_vmem [thread:$0]  %s1, 128, %s156, [#allocation7], 64, 64, 4
        $region16: #{tpu_custom_call.1} parent=11 // pred_fallthru
          _
        // Predicated region
        $region17: #{tpu_custom_call.1} parent=11 // pred_check
          %p162 = pneg %p87
        $region18: #{tpu_custom_call.1} parent=11 // pred_check_branch
          %164 = sbr.rel (%p162) target = $region20
        $region19: #{tpu_custom_call.1} parent=11 // pred_region
          %s166 = ssub.s32 2048, 2048
          %167 = vsyncadd [#allocation7], %s166
          %s168 = sshll.u32 [#allocation8], 4
          %s169 = int_to_ptr.vmem [resolvable:$true] %s168
          %174 = dma.hbm_to_vmem [thread:$0]  %s2, 2048, %s169, [#allocation7], 128, 128, 8
        $region20: #{tpu_custom_call.1} parent=11 // pred_fallthru
          _
      $region12: #{tpu_custom_call.1} parent=5 // pred_fallthru
        _
      %p175 = scmp.lt.s32.totalorder %s19, 8
      // Predicated region
      $region21: #{tpu_custom_call.1} parent=5 // pred_check
        %p176 = pneg %p175
      $region22: #{tpu_custom_call.1} parent=5 // pred_check_branch
        %178 = sbr.rel (%p176) target = $region24
      $region23: #{tpu_custom_call.1} parent=5 // pred_region
        // Predicated region
        $region25: #{tpu_custom_call.1} parent=23 // pred_check
          %p179 = pneg %p39
        $region26: #{tpu_custom_call.1} parent=23 // pred_check_branch
          %181 = sbr.rel (%p179) target = $region28
        $region27: #{tpu_custom_call.1} parent=23 // pred_region
          %s182 = sand.u32 %s29, 1
          %s183 = scalar_lea.sflag [#allocation4], %s182
          %s184 = sand.u32 %s29, 1
          %s185 = smul.addr %s184, 32
          %s186 = scalar_lea.vmem [#allocation3], %s185
          %s188 = ssub.s32 512, 512
          %189 = vsyncadd %s183, %s188
          %s190 = smul.addr %s19, 4
          %s191 = smul.addr %s190, 128
          %s192 = scalar_lea.hbm %s0, %s191
          %s193 = sshll.u32 %s186, 4
          %s194 = int_to_ptr.vmem [resolvable:$true] %s193
          %199 = dma.hbm_to_vmem [thread:$0]  %s192, 512, %s194, %s183, 256, 256, 16
        $region28: #{tpu_custom_call.1} parent=23 // pred_fallthru
          _
      $region24: #{tpu_custom_call.1} parent=5 // pred_fallthru
        _
      %p200 = scmp.le.s32.totalorder 1, %s19
      %p201 = scmp.lt.s32.totalorder %s19, 9
      %p202 = pnand %p200, %p201
      %p203 = pneg %p202
      // Predicated region
      $region29: #{tpu_custom_call.1} parent=5 // pred_check
        _
      $region30: #{tpu_custom_call.1} parent=5 // pred_check_branch
        %205 = sbr.rel (%p202) target = $region32
      $region31: #{tpu_custom_call.1} parent=5 // pred_region
        %s206 = ssub.s32 %s19, 1
        %s207 = sand.u32 %s32, 1
        %s208 = scalar_lea.sflag [#allocation4], %s207
        %s209 = sand.u32 %s32, 1
        %s210 = smul.addr %s209, 32
        %s211 = scalar_lea.vmem [#allocation3], %s210
        // Predicated region
        $region33: #{tpu_custom_call.1} parent=31 // pred_check
          %p212 = pneg %p45
        $region34: #{tpu_custom_call.1} parent=31 // pred_check_branch
          %214 = sbr.rel (%p212) target = $region36
        $region35: #{tpu_custom_call.1} parent=31 // pred_region
          %215 = dma.done %s208, 512
        $region36: #{tpu_custom_call.1} parent=31 // pred_fallthru
          _
        // Predicated region
        $region37: #{tpu_custom_call.1} parent=31 // pred_check
          %p216 = pneg %p66
        $region38: #{tpu_custom_call.1} parent=31 // pred_check_branch
          %218 = sbr.rel (%p216) target = $region40
        $region39: #{tpu_custom_call.1} parent=31 // pred_region
          %219 = dma.done [#allocation7], 128
        $region40: #{tpu_custom_call.1} parent=31 // pred_fallthru
          _
        // Predicated region
        $region41: #{tpu_custom_call.1} parent=31 // pred_check
          %p220 = pneg %p87
        $region42: #{tpu_custom_call.1} parent=31 // pred_check_branch
          %222 = sbr.rel (%p220) target = $region44
        $region43: #{tpu_custom_call.1} parent=31 // pred_region
          %223 = dma.done [#allocation7], 2048
        $region44: #{tpu_custom_call.1} parent=31 // pred_fallthru
          _
        %s224 = sand.u32 %s32, 1
        %s225 = scalar_lea.sflag [#allocation4], %s224
        %s226 = sand.u32 %s32, 1
        %s227 = smul.addr %s226, 32
        %s228 = scalar_lea.vmem [#allocation3], %s227
        %p229 = pneg %p45
        %p230 = pneg %p42
        %p231 = pneg %p66
        %p232 = pneg %p63
        %p233 = pneg %p87
        %p234 = pneg %p84
        %p235 = pneg %p113
        %p236 = pneg %p110
        %s237 = sand.u32 %s100, 1
        %s238 = scalar_lea.sflag [#allocation5], %s237
        %s239 = sand.u32 %s100, 1
        %s240 = smul.addr %s239, 16
        %s241 = scalar_lea.vmem [#allocation9], %s240
        %p242 = pneg %p134
        %p243 = pneg %p131
        %p245 = scmp.eq.s32.totalorder %s24, 0
        // Predicated region
        $region45: #{tpu_custom_call.1} parent=31 // pred_check
          %p246 = pneg %p245
        $region46: #{tpu_custom_call.1} parent=31 // pred_check_branch
          %248 = sbr.rel (%p246) target = $region48
        $region47: #{tpu_custom_call.1} parent=31 // pred_region
          %v249 = vld [vmem:[#allocation6] sm:$0xf]
          %v250 = vld [vmem:[#allocation6 + $0x4] sm:$0xf]
          %251 = vst [vmem:[#allocation2] sm:$0xf] %v249
          %252 = vst [vmem:[#allocation2 + $0x4] sm:$0xf] %v250
        $region48: #{tpu_custom_call.1} parent=31 // pred_fallthru
          _
        %v253 = vld [vmem:[%s211] sm:$0xff]
        %v254 = vld [vmem:[%s211 + $0x8] sm:$0xff]
        %v255 = vld [vmem:[%s211 + $0x10] sm:$0xff]
        %v256 = vld [vmem:[%s211 + $0x18] sm:$0xff]
        %v257 = vld [vmem:[#allocation2] sm:$0xf]
        %v258 = vld [vmem:[#allocation2 + $0x4] sm:$0xf]
        %v259 = vld [vmem:[#allocation8] sm:$0xff]
        %v260 = vld [vmem:[#allocation8 + $0x8] sm:$0xff]
        %v261 = vld [vmem:[#allocation8 + $0x10] sm:$0xff]
        %v262 = vld [vmem:[#allocation8 + $0x18] sm:$0xff]
        %v263 = vld [vmem:[#allocation8 + $0x20] sm:$0xff]
        %v264 = vld [vmem:[#allocation8 + $0x28] sm:$0xff]
        %v265 = vld [vmem:[#allocation8 + $0x30] sm:$0xff]
        %v266 = vld [vmem:[#allocation8 + $0x38] sm:$0xff]
        %v267 = vld [vmem:[#allocation8 + $0x40] sm:$0xff]
        %v268 = vld [vmem:[#allocation8 + $0x48] sm:$0xff]
        %v269 = vld [vmem:[#allocation8 + $0x50] sm:$0xff]
        %v270 = vld [vmem:[#allocation8 + $0x58] sm:$0xff]
        %v271 = vld [vmem:[#allocation8 + $0x60] sm:$0xff]
        %v272 = vld [vmem:[#allocation8 + $0x68] sm:$0xff]
        %v273 = vld [vmem:[#allocation8 + $0x70] sm:$0xff]
        %v274 = vld [vmem:[#allocation8 + $0x78] sm:$0xff]
        %v277 = vunpack.c.l.b16 %v257
        %v278 = vunpack.c.l.b16 %v258
        %v279 = vpack.c.b16 %v278, %v277
        %v297 = vunpack.c.l.b16 %v259
        %v298 = vunpack.c.h.b16 %v259
        %v299 = vunpack.c.l.b16 %v260
        %v300 = vunpack.c.h.b16 %v260
        %v301 = vunpack.c.l.b16 %v261
        %v302 = vunpack.c.h.b16 %v261
        %v303 = vunpack.c.l.b16 %v262
        %v304 = vunpack.c.h.b16 %v262
        %v305 = vunpack.c.l.b16 %v263
        %v306 = vunpack.c.h.b16 %v263
        %v307 = vunpack.c.l.b16 %v264
        %v308 = vunpack.c.h.b16 %v264
        %v309 = vunpack.c.l.b16 %v265
        %v310 = vunpack.c.h.b16 %v265
        %v311 = vunpack.c.l.b16 %v266
        %v312 = vunpack.c.h.b16 %v266
        %v313 = vunpack.c.l.b16 %v267
        %v314 = vunpack.c.h.b16 %v267
        %v315 = vunpack.c.l.b16 %v268
        %v316 = vunpack.c.h.b16 %v268
        %v317 = vunpack.c.l.b16 %v269
        %v318 = vunpack.c.h.b16 %v269
        %v319 = vunpack.c.l.b16 %v270
        %v320 = vunpack.c.h.b16 %v270
        %v321 = vunpack.c.l.b16 %v271
        %v322 = vunpack.c.h.b16 %v271
        %v323 = vunpack.c.l.b16 %v272
        %v324 = vunpack.c.h.b16 %v272
        %v325 = vunpack.c.l.b16 %v273
        %v326 = vunpack.c.h.b16 %v273
        %v327 = vunpack.c.l.b16 %v274
        %v328 = vunpack.c.h.b16 %v274
        %v329 = vpack.c.b16 %v299, %v297
        %v330 = vpack.c.b16 %v300, %v298
        %v331 = vpack.c.b16 %v303, %v301
        %v332 = vpack.c.b16 %v304, %v302
        %v333 = vpack.c.b16 %v307, %v305
        %v334 = vpack.c.b16 %v308, %v306
        %v335 = vpack.c.b16 %v311, %v309
        %v336 = vpack.c.b16 %v312, %v310
        %v337 = vpack.c.b16 %v315, %v313
        %v338 = vpack.c.b16 %v316, %v314
        %v339 = vpack.c.b16 %v319, %v317
        %v340 = vpack.c.b16 %v320, %v318
        %v341 = vpack.c.b16 %v323, %v321
        %v342 = vpack.c.b16 %v324, %v322
        %v343 = vpack.c.b16 %v327, %v325
        %v344 = vpack.c.b16 %v328, %v326
        %361 = vmatprep.subr.bf16.mxu0 %v344
        %362 = vmatpush1.bf16.msra.mxu0 %v343
        %363 = vmatprep.subr.bf16.mxu0 %v342
        %364 = vmatpush1.bf16.msra.mxu0 %v341
        %365 = vmatprep.subr.bf16.mxu0 %v340
        %366 = vmatpush1.bf16.msra.mxu0 %v339
        %367 = vmatprep.subr.bf16.mxu0 %v338
        %368 = vmatpush1.bf16.msra.mxu0 %v337
        %369 = vmatprep.subr.bf16.mxu0 %v336
        %370 = vmatpush1.bf16.msra.mxu0 %v335
        %371 = vmatprep.subr.bf16.mxu0 %v334
        %372 = vmatpush1.bf16.msra.mxu0 %v333
        %373 = vmatprep.subr.bf16.mxu0 %v332
        %374 = vmatpush1.bf16.msra.mxu0 %v331
        %375 = vmatprep.subr.bf16.mxu0 %v330
        %376 = vmatpush1.bf16.msra.mxu0 %v329
        %377 = vmatprep.subr.bf16.mxu0 0
        %378 = vmatpush2.bf16.msra.mxu0 0
        %379 = vmatprep.subr.bf16.mxu0 0
        %380 = vmatpush2.bf16.msra.mxu0 0
        %381 = vmatprep.subr.bf16.mxu0 0
        %382 = vmatpush2.bf16.msra.mxu0 0
        %383 = vmatprep.subr.bf16.mxu0 0
        %384 = vmatpush2.bf16.msra.mxu0 0
        %385 = vmatprep.subr.bf16.mxu0 0
        %386 = vmatpush2.bf16.msra.mxu0 0
        %387 = vmatprep.subr.bf16.mxu0 0
        %388 = vmatpush2.bf16.msra.mxu0 0
        %389 = vmatprep.subr.bf16.mxu0 0
        %390 = vmatpush2.bf16.msra.mxu0 0
        %391 = vmatprep.subr.bf16.mxu0 0
        %392 = vmatpush2.bf16.msra.mxu0 0
        %393 = vmatprep.mubr.bf16.mxu0 0
        %394 = vmatmul.mubr.bf16.gmra.mxu0 %v279
        %v395 = vpop.f32.mrf.mxu0
        %v396 = vadd.f32 0.0, %v395
        %v397 = vpop.f32.mrf.mxu0
        %v398 = vadd.f32 0.0, %v397
        %v399 = vpop.f32.mrf.mxu0
        %v400 = vadd.f32 0.0, %v399
        %v401 = vpop.f32.mrf.mxu0
        %v402 = vadd.f32 0.0, %v401
        %403 = vdwg.mxu0
        %v404 = vadd.f32 %v253, %v396
        %v405 = vadd.f32 %v254, %v398
        %v406 = vadd.f32 %v255, %v400
        %v407 = vadd.f32 %v256, %v402
        %408 = vmax.xlane.f32.xlu0 %v405
        %v409 = vpop.xlane.xlu0 %408
        %410 = vmax.xlane.f32.xlu0 %v407
        %v411 = vpop.xlane.xlu0 %410
        %v412 = vsub.f32 %v405, %v409
        %v413 = vsub.f32 %v407, %v411
        %v414 = vmul.f32 %v412, 1.442695
        %v415 = vpow.pop %v414
        %v416 = vmul.f32 %v413, 1.442695
        %v417 = vpow.pop %v416
        %418 = vadd.xlane.f32.xlu0 %v415
        %v419 = vpop.xlane.xlu0 %418
        %420 = vadd.xlane.f32.xlu0 %v417
        %v421 = vpop.xlane.xlu0 %420
        %v422 = vlog2.pop %v419
        %v423 = vmul.f32 %v422, 0.6931472
        %v424 = vlog2.pop %v421
        %v425 = vmul.f32 %v424, 0.6931472
        %v426 = vsub.f32 %v412, %v423
        %v427 = vsub.f32 %v413, %v425
        %428 = vst [vmem:[%s241] sm:$0xff] %v426
        %429 = vst [vmem:[%s241 + $0x8] sm:$0xff] %v427
        %v430 = vpack.c.bf16 %v406, %v404
        %v432 = vunpack.c.l.b16 %v430
        %v433 = vunpack.c.h.b16 %v430
        %v434 = vpack.c.b16 %v432, %v432
        %v435 = vpack.c.b16 %v433, %v433
        %438 = vst [vmem:[#allocation2] sm:$0xf] %v434
        %439 = vst [vmem:[#allocation2 + $0x4] sm:$0xf] %v435
        %p440 = scmp.eq.s32.totalorder %s24, 7
        // Predicated region
        $region49: #{tpu_custom_call.1} parent=31 // pred_check
          %p441 = pneg %p440
        $region50: #{tpu_custom_call.1} parent=31 // pred_check_branch
          %443 = sbr.rel (%p441) target = $region52
        $region51: #{tpu_custom_call.1} parent=31 // pred_region
          %444 = vst [vmem:[#allocation10] sm:$0xff] %v404
          %445 = vst [vmem:[#allocation10 + $0x8] sm:$0xff] %v406
        $region52: #{tpu_custom_call.1} parent=31 // pred_fallthru
          _
        %s446 = sand.u32 %s100, 1
        %s447 = scalar_lea.sflag [#allocation5], %s446
        %s448 = sand.u32 %s100, 1
        %s449 = smul.addr %s448, 16
        %s450 = scalar_lea.vmem [#allocation9], %s449
        // Predicated region
        $region53: #{tpu_custom_call.1} parent=31 // pred_check
          %p451 = pneg %p110
        $region54: #{tpu_custom_call.1} parent=31 // pred_check_branch
          %453 = sbr.rel (%p451) target = $region56
        $region55: #{tpu_custom_call.1} parent=31 // pred_region
          %s455 = ssub.s32 256, 256
          %456 = vsyncadd %s447, %s455
          %s457 = smul.addr %s24, 2
          %s458 = smul.addr %s457, 128
          %s459 = scalar_lea.hbm %s3, %s458
          %s460 = sshll.u32 %s450, 4
          %s461 = int_to_ptr.vmem [resolvable:$true] %s460
          %466 = dma.vmem_to_hbm [thread:$0]  %s461, 256, %s459, %s447, 128, 128, 8
        $region56: #{tpu_custom_call.1} parent=31 // pred_fallthru
          _
        // Predicated region
        $region57: #{tpu_custom_call.1} parent=31 // pred_check
          %p467 = pneg %p131
        $region58: #{tpu_custom_call.1} parent=31 // pred_check_branch
          %469 = sbr.rel (%p467) target = $region60
        $region59: #{tpu_custom_call.1} parent=31 // pred_region
          %s471 = ssub.s32 256, 256
          %472 = vsyncadd [#allocation11], %s471
          %s473 = sshll.u32 [#allocation10], 4
          %s474 = int_to_ptr.vmem [resolvable:$true] %s473
          %479 = dma.vmem_to_hbm [thread:$0]  %s474, 256, %s4, [#allocation11], 128, 128, 8
        $region60: #{tpu_custom_call.1} parent=31 // pred_fallthru
          _
        // Predicated region
        $region61: #{tpu_custom_call.1} parent=31 // pred_check
          %p480 = pneg %p131
        $region62: #{tpu_custom_call.1} parent=31 // pred_check_branch
          %482 = sbr.rel (%p480) target = $region64
        $region63: #{tpu_custom_call.1} parent=31 // pred_region
          %483 = dma.done [#allocation11], 256
        $region64: #{tpu_custom_call.1} parent=31 // pred_fallthru
          _
      $region32: #{tpu_custom_call.1} parent=5 // pred_fallthru
        _
      %p484 = scmp.le.s32.totalorder 2, %s19
      // Predicated region
      $region65: #{tpu_custom_call.1} parent=5 // pred_check
        %p485 = pneg %p484
      $region66: #{tpu_custom_call.1} parent=5 // pred_check_branch
        %487 = sbr.rel (%p485) target = $region68
      $region67: #{tpu_custom_call.1} parent=5 // pred_region
        %s488 = ssub.s32 %s19, 2
        // Predicated region
        $region69: #{tpu_custom_call.1} parent=67 // pred_check
          %p489 = pneg %p116
        $region70: #{tpu_custom_call.1} parent=67 // pred_check_branch
          %491 = sbr.rel (%p489) target = $region72
        $region71: #{tpu_custom_call.1} parent=67 // pred_region
          %s492 = sand.u32 %s101, 1
          %s493 = scalar_lea.sflag [#allocation5], %s492
          %s494 = sand.u32 %s101, 1
          %s495 = smul.addr %s494, 16
          %s496 = scalar_lea.vmem [#allocation9], %s495
          %497 = dma.done %s493, 256
        $region72: #{tpu_custom_call.1} parent=67 // pred_fallthru
          _
      $region68: #{tpu_custom_call.1} parent=5 // pred_fallthru
        _
    $region6: #{tpu_custom_call.1} parent=1 // loop_footer
      %s23 = sadd.s32 1, %s19
    $region7: #{tpu_custom_call.1} parent=1 // loop_footer_branch
      %18 = sbr.rel target = $region3
    $region8: #{tpu_custom_call.1} parent=1 // loop_exit
      _
    %498 = vsyncpa [#allocation4], 1
    %s499 = scalar_lea.sflag [#allocation4], 1
    %500 = vsyncpa %s499, 1
    %501 = vsyncpa [#allocation7], 1
    %502 = vsyncpa [#allocation5], 1
    %s503 = scalar_lea.sflag [#allocation5], 1
    %504 = vsyncpa %s503, 1
    %505 = vsyncpa [#allocation11], 1

</llo_original>
